<compile_context>
chip_gen: v7x
topology: tpu7x:2x2x1
jax: 0.10.0
libtpu: 0.0.40
codegen_flags: <defaults>
</compile_context>

<pallas_src>
import math
from functools import partial

import jax
import jax.numpy as jnp
from jax import lax
from jax.experimental import pallas as pl
from jax.experimental.pallas import tpu as pltpu

_GAMMA = 0.5772156649015329     # Euler–Mascheroni constant
_LANE = 128
_SERIES_MAX = 14.0              # power series for x <= 14, asymptotic expansion above
_HEAD_TERMS = 12                # series terms always evaluated (enough for |x| <= 1)
_FULL_TERMS = 32                # series terms when the block contains some x > 1
_ASYM_TERMS = 15                # k!/x^k terms, k = 0 .. 14
_MAX_BLOCK_ROWS = 2048          # (2048,128) f32 = 1 MiB/block; ~4 MiB double-buffered I/O

# Horner coefficients (python floats, all representable as normal f32).
_SERIES_COEFFS = tuple(1.0 / (k * math.factorial(k)) for k in range(1, _FULL_TERMS + 1))
_ASYM_COEFFS = tuple(float(math.factorial(k)) for k in range(_ASYM_TERMS))


def _series_horner(xs, n_terms):
    """sum_{k=1..n} xs^k/(k*k!)  =  xs * Horner(c_n, ..., c_1)(xs), c_k = 1/(k*k!)."""
    coeffs = _SERIES_COEFFS[:n_terms]
    p = coeffs[-1]
    for c in reversed(coeffs[:-1]):
        p = p * xs + c                # 2 VALU ops / term (no f32 FMA on v5e/v6e anyway)
    return p * xs


def _expi_eval(x, x_gate):
    """Elementwise Ei(x) in f32; expensive tails gated per block via x_gate reductions."""
    mx = jnp.max(x_gate)              # block scalars driving the lax.cond gates
    mn = jnp.min(x_gate)

    # --- power series (-1 <= x <= 14):  Ei(x) = gamma + ln|x| + sum_k x^k/(k*k!)
    xs = jnp.clip(x, -1.0, _SERIES_MAX)          # clamp so unselected lanes stay finite
    ssum = lax.cond(mx > 1.0,
                    lambda v: _series_horner(v, _FULL_TERMS),   # only when some x > 1
                    lambda v: _series_horner(v, _HEAD_TERMS),   # hot path, |x| <= 1
                    xs)
    out = _GAMMA + jnp.log(jnp.abs(x)) + ssum    # log(0) = -inf  ->  Ei(0) = -inf

    e = jnp.exp(x)    # shared EUP op, reused by both gated tails (EUP slot is ~idle)

    # --- rational branch (x < -1):  Ei(x) = exp(x) * P(-x) / (x * Q(-x))   (A&S 5.1.56)
    def _with_rational(o):
        xn = jnp.minimum(x, -1.0)
        z = -xn
        a1, a2, a3, a4 = 8.5733287401, 18.0590169730, 8.6347608925, 0.2677737343
        b1, b2, b3, b4 = 9.5733223454, 25.6329561486, 21.0996530827, 3.9584969228
        num = (((z + a1) * z + a2) * z + a3) * z + a4
        den = (((z + b1) * z + b2) * z + b3) * z + b4
        d = xn * den
        r = pl.reciprocal(d, approx=True)        # EUP vrcp instead of a VALU divide
        r = r * (2.0 - d * r)                    # one Newton step -> ~f32-exact 1/d
        return jnp.where(x < -1.0, e * num * r, o)

    out = lax.cond(mn < -1.0, _with_rational, lambda o: o, out)

    # --- asymptotic branch (x > 14):  Ei(x) ~ exp(x)/x * sum_k k!/x^k   (Horner in 1/x)
    def _with_asym(o):
        inv = 1.0 / jnp.maximum(x, _SERIES_MAX)
        s = _ASYM_COEFFS[-1]
        for c in reversed(_ASYM_COEFFS[:-1]):
            s = s * inv + c
        return jnp.where(x > _SERIES_MAX, e * inv * s, o)

    out = lax.cond(mx > _SERIES_MAX, _with_asym, lambda o: o, out)
    return out


def _expi_kernel(x_ref, o_ref, *, guard_oob):
    x = x_ref[...].astype(jnp.float32)   # in-vreg cast; HBM traffic stays at input width
    if guard_oob:
        # Last block may read past the array end: stale-VMEM garbage (possibly NaN) must
        # not flip the per-block branch gates.  Real lanes are unaffected.
        x_gate = jnp.where(x == x, x, 1.0)
    else:
        x_gate = x
    o_ref[...] = _expi_eval(x, x_gate).astype(o_ref.dtype)


def expi_pallas(x):
    """Elementwise scipy.special.expi(x), any shape / float dtype (computed in f32)."""
    orig_shape = x.shape
    orig_dtype = x.dtype
    flat = x.reshape(-1)
    n = flat.shape[0]
    if n == 0:
        return x

    rows = pl.cdiv(n, _LANE)
    lane_pad = rows * _LANE - n
    if lane_pad:
        # Unavoidable (<=127-elem) pad to make the slab lane-dense; 1.0 keeps tails off.
        flat = jnp.pad(flat, (0, lane_pad), constant_values=1.0)
    x2 = flat.reshape(rows, _LANE)

    itemsize = jnp.dtype(orig_dtype).itemsize
    row_align = max(8, 32 // max(itemsize, 1))   # 8 for f32, 16 for bf16/f16
    if rows <= row_align:
        block_rows = rows                        # single block covering the full row dim
    else:
        # Aim for >= 4 grid steps (feeds both v7x TensorCores and keeps the DMA pipeline
        # busy) but never below one aligned row-tile; cap at 1 MiB f32 blocks.
        block_rows = min(_MAX_BLOCK_ROWS,
                         max(row_align, (rows // 4) // row_align * row_align))
    grid = pl.cdiv(rows, block_rows)
    guard_oob = (rows % block_rows) != 0         # last block reads past the array

    out = pl.pallas_call(
        partial(_expi_kernel, guard_oob=guard_oob),
        out_shape=jax.ShapeDtypeStruct((rows, _LANE), orig_dtype),
        grid_spec=pltpu.PrefetchScalarGridSpec(
            num_scalar_prefetch=0,
            grid=(grid,),
            in_specs=[pl.BlockSpec((block_rows, _LANE), lambda i: (i, 0))],
            out_specs=pl.BlockSpec((block_rows, _LANE), lambda i: (i, 0)),
        ),
        compiler_params=pltpu.CompilerParams(dimension_semantics=("parallel",)),
    )(x2)

    out_flat = out.reshape(-1)
    if lane_pad:
        out_flat = out_flat[:n]
    return out_flat.reshape(orig_shape)


# TODO(synk): only the forward pass is implemented; ExpiFunction.backward (exp(x)/x VJP)
# would need a jax.custom_vjp wrapper around expi_pallas.

if __name__ == "__main__":
    key = jax.random.PRNGKey(0)

    # Typical PROSPECT usage feeds negative absorption values; also cover some positives.
    x = jax.random.uniform(key, (2, 4, 16, 16), dtype=jnp.float32, minval=-5.0, maxval=3.0)
    y = expi_pallas(x)
    jax.block_until_ready(y)
    assert y.shape == x.shape and y.dtype == x.dtype
    assert bool(jnp.all(jnp.isfinite(y)))

    # Sanity check against known Ei values (scipy.special.expi reference constants).
    probe = jnp.array([-2.0, -1.0, -0.5, 0.5, 1.0, 2.0, 5.0], dtype=jnp.float32)
    expected = jnp.array(
        [-0.04890051070806112, -0.21938393439552026, -0.5597735947761608,
         0.4542199048631736, 1.8951178163559368, 4.954234356001890,
         40.18527535580318],
        dtype=jnp.float32,
    )
    got = expi_pallas(probe)
    jax.block_until_ready(got)
    assert bool(jnp.allclose(got, expected, rtol=1e-4, atol=1e-5)), (got, expected)

    # Exercise the gated asymptotic branch (x > 14): Ei(25) ~= 3.0059509e9.
    big = expi_pallas(jnp.array([25.0], dtype=jnp.float32))
    jax.block_until_ready(big)
    assert bool(jnp.allclose(big[0], 3.0059509e9, rtol=1e-3)), big

    print("KERNEL_OK")
</pallas_src>

<mosaic_0001>
module attributes {stable_mosaic.version = 11 : i64} {
  func.func @_expi_kernel(%arg0: i32, %arg1: memref<8x128xf32, #tpu.memory_space<vmem>>, %arg2: memref<8x128xf32, #tpu.memory_space<vmem>>) attributes {dimension_semantics = [#tpu.dimension_semantics<parallel>], iteration_bounds = array<i64: 2>, scalar_prefetch = 0 : i64, scratch_operands = 0 : i64, tpu.core_type = #tpu.core_type<tc>, window_params = [{transform_indices = @transform_0, window_bounds = array<i64: 8, 128>}, {transform_indices = @transform_1, window_bounds = array<i64: 8, 128>}]} {
    %c0 = arith.constant 0 : index
    %c0_0 = arith.constant 0 : index
    %0 = vector.load %arg1[%c0, %c0_0] : memref<8x128xf32, #tpu.memory_space<vmem>>, vector<8x128xf32>
    %1 = vector.shape_cast %0 : vector<8x128xf32> to vector<1x8x128xf32>
    %cst = arith.constant dense<0xFF800000> : vector<1xf32>
    %2 = vector.multi_reduction <maximumf>, %1, %cst [1, 2] : vector<1x8x128xf32> to vector<1xf32>
    %3 = vector.shape_cast %2 : vector<1xf32> to vector<1x1x1xf32>
    %4 = vector.extract %3[0, 0, 0] : f32 from vector<1x1x1xf32>
    %5 = vector.shape_cast %0 : vector<8x128xf32> to vector<1x8x128xf32>
    %cst_1 = arith.constant dense<0x7F800000> : vector<1xf32>
    %6 = vector.multi_reduction <minimumf>, %5, %cst_1 [1, 2] : vector<1x8x128xf32> to vector<1xf32>
    %7 = vector.shape_cast %6 : vector<1xf32> to vector<1x1x1xf32>
    %8 = vector.extract %7[0, 0, 0] : f32 from vector<1x1x1xf32>
    %cst_2 = arith.constant -1.000000e+00 : f32
    %cst_3 = arith.constant 1.400000e+01 : f32
    %9 = vector.broadcast %cst_2 : f32 to vector<8x128xf32>
    %10 = arith.maximumf %9, %0 : vector<8x128xf32>
    %11 = vector.broadcast %cst_3 : f32 to vector<8x128xf32>
    %12 = arith.minimumf %11, %10 : vector<8x128xf32>
    %cst_4 = arith.constant 1.000000e+00 : f32
    %13 = arith.cmpf ogt, %4, %cst_4 : f32
    %14 = arith.extui %13 : i1 to i32
    %c0_i32 = arith.constant 0 : i32
    %15 = arith.cmpi ne, %14, %c0_i32 : i32
    %16 = scf.if %15 -> (vector<8x128xf32>) {
      %cst_12 = arith.constant 1.18762208E-37 : f32
      %32 = vector.broadcast %cst_12 : f32 to vector<8x128xf32>
      %33 = arith.mulf %32, %12 : vector<8x128xf32>
      %cst_13 = arith.constant 3.92298388E-36 : f32
      %34 = vector.broadcast %cst_13 : f32 to vector<8x128xf32>
      %35 = arith.addf %33, %34 : vector<8x128xf32>
      %36 = arith.mulf %35, %12 : vector<8x128xf32>
      %cst_14 = arith.constant 1.25666258E-34 : f32
      %37 = vector.broadcast %cst_14 : f32 to vector<8x128xf32>
      %38 = arith.addf %36, %37 : vector<8x128xf32>
      %39 = arith.mulf %38, %12 : vector<8x128xf32>
      %cst_15 = arith.constant 3.8999872E-33 : f32
      %40 = vector.broadcast %cst_15 : f32 to vector<8x128xf32>
      %41 = arith.addf %39, %40 : vector<8x128xf32>
      %42 = arith.mulf %41, %12 : vector<8x128xf32>
      %cst_16 = arith.constant 1.17138905E-31 : f32
      %43 = vector.broadcast %cst_16 : f32 to vector<8x128xf32>
      %44 = arith.addf %42, %43 : vector<8x128xf32>
      %45 = arith.mulf %44, %12 : vector<8x128xf32>
      %cst_17 = arith.constant 3.40136644E-30 : f32
      %46 = vector.broadcast %cst_17 : f32 to vector<8x128xf32>
      %47 = arith.addf %45, %46 : vector<8x128xf32>
      %48 = arith.mulf %47, %12 : vector<8x128xf32>
      %cst_18 = arith.constant 9.53690897E-29 : f32
      %49 = vector.broadcast %cst_18 : f32 to vector<8x128xf32>
      %50 = arith.addf %48, %49 : vector<8x128xf32>
      %51 = arith.mulf %50, %12 : vector<8x128xf32>
      %cst_19 = arith.constant 2.57878014E-27 : f32
      %52 = vector.broadcast %cst_19 : f32 to vector<8x128xf32>
      %53 = arith.addf %51, %52 : vector<8x128xf32>
      %54 = arith.mulf %53, %12 : vector<8x128xf32>
      %cst_20 = arith.constant 6.7155735E-26 : f32
      %55 = vector.broadcast %cst_20 : f32 to vector<8x128xf32>
      %56 = arith.addf %54, %55 : vector<8x128xf32>
      %57 = arith.mulf %56, %12 : vector<8x128xf32>
      %cst_21 = arith.constant 1.68181319E-24 : f32
      %58 = vector.broadcast %cst_21 : f32 to vector<8x128xf32>
      %59 = arith.addf %57, %58 : vector<8x128xf32>
      %60 = arith.mulf %59, %12 : vector<8x128xf32>
      %cst_22 = arith.constant 4.04399603E-23 : f32
      %61 = vector.broadcast %cst_22 : f32 to vector<8x128xf32>
      %62 = arith.addf %60, %61 : vector<8x128xf32>
      %63 = arith.mulf %62, %12 : vector<8x128xf32>
      %cst_23 = arith.constant 9.32044839E-22 : f32
      %64 = vector.broadcast %cst_23 : f32 to vector<8x128xf32>
      %65 = arith.addf %63, %64 : vector<8x128xf32>
      %66 = arith.mulf %65, %12 : vector<8x128xf32>
      %cst_24 = arith.constant 2.05515883E-20 : f32
      %67 = vector.broadcast %cst_24 : f32 to vector<8x128xf32>
      %68 = arith.addf %66, %67 : vector<8x128xf32>
      %69 = arith.mulf %68, %12 : vector<8x128xf32>
      %cst_25 = arith.constant 4.32665014E-19 : f32
      %70 = vector.broadcast %cst_25 : f32 to vector<8x128xf32>
      %71 = arith.addf %69, %70 : vector<8x128xf32>
      %72 = arith.mulf %71, %12 : vector<8x128xf32>
      %cst_26 = arith.constant 8.67733721E-18 : f32
      %73 = vector.broadcast %cst_26 : f32 to vector<8x128xf32>
      %74 = arith.addf %72, %73 : vector<8x128xf32>
      %75 = arith.mulf %74, %12 : vector<8x128xf32>
      %cst_27 = arith.constant 1.65379835E-16 : f32
      %76 = vector.broadcast %cst_27 : f32 to vector<8x128xf32>
      %77 = arith.addf %75, %76 : vector<8x128xf32>
      %78 = arith.mulf %77, %12 : vector<8x128xf32>
      %cst_28 = arith.constant 2.98717329E-15 : f32
      %79 = vector.broadcast %cst_28 : f32 to vector<8x128xf32>
      %80 = arith.addf %78, %79 : vector<8x128xf32>
      %81 = arith.mulf %80, %12 : vector<8x128xf32>
      %cst_29 = arith.constant 5.09810903E-14 : f32
      %82 = vector.broadcast %cst_29 : f32 to vector<8x128xf32>
      %83 = arith.addf %81, %82 : vector<8x128xf32>
      %84 = arith.mulf %83, %12 : vector<8x128xf32>
      %cst_30 = arith.constant 8.19338954E-13 : f32
      %85 = vector.broadcast %cst_30 : f32 to vector<8x128xf32>
      %86 = arith.addf %84, %85 : vector<8x128xf32>
      %87 = arith.mulf %86, %12 : vector<8x128xf32>
      %cst_31 = arith.constant 1.23531107E-11 : f32
      %88 = vector.broadcast %cst_31 : f32 to vector<8x128xf32>
      %89 = arith.addf %87, %88 : vector<8x128xf32>
      %90 = arith.mulf %89, %12 : vector<8x128xf32>
      %cst_32 = arith.constant 1.73972975E-10 : f32
      %91 = vector.broadcast %cst_32 : f32 to vector<8x128xf32>
      %92 = arith.addf %90, %91 : vector<8x128xf32>
      %93 = arith.mulf %92, %12 : vector<8x128xf32>
      %cst_33 = arith.constant 2.27746444E-9 : f32
      %94 = vector.broadcast %cst_33 : f32 to vector<8x128xf32>
      %95 = arith.addf %93, %94 : vector<8x128xf32>
      %96 = arith.mulf %95, %12 : vector<8x128xf32>
      %cst_34 = arith.constant 2.755732E-8 : f32
      %97 = vector.broadcast %cst_34 : f32 to vector<8x128xf32>
      %98 = arith.addf %96, %97 : vector<8x128xf32>
      %99 = arith.mulf %98, %12 : vector<8x128xf32>
      %cst_35 = arith.constant 3.06192447E-7 : f32
      %100 = vector.broadcast %cst_35 : f32 to vector<8x128xf32>
      %101 = arith.addf %99, %100 : vector<8x128xf32>
      %102 = arith.mulf %101, %12 : vector<8x128xf32>
      %cst_36 = arith.constant 3.10019846E-6 : f32
      %103 = vector.broadcast %cst_36 : f32 to vector<8x128xf32>
      %104 = arith.addf %102, %103 : vector<8x128xf32>
      %105 = arith.mulf %104, %12 : vector<8x128xf32>
      %cst_37 = arith.constant 2.83446716E-5 : f32
      %106 = vector.broadcast %cst_37 : f32 to vector<8x128xf32>
      %107 = arith.addf %105, %106 : vector<8x128xf32>
      %108 = arith.mulf %107, %12 : vector<8x128xf32>
      %cst_38 = arith.constant 2.31481477E-4 : f32
      %109 = vector.broadcast %cst_38 : f32 to vector<8x128xf32>
      %110 = arith.addf %108, %109 : vector<8x128xf32>
      %111 = arith.mulf %110, %12 : vector<8x128xf32>
      %cst_39 = arith.constant 0.00166666671 : f32
      %112 = vector.broadcast %cst_39 : f32 to vector<8x128xf32>
      %113 = arith.addf %111, %112 : vector<8x128xf32>
      %114 = arith.mulf %113, %12 : vector<8x128xf32>
      %cst_40 = arith.constant 0.010416667 : f32
      %115 = vector.broadcast %cst_40 : f32 to vector<8x128xf32>
      %116 = arith.addf %114, %115 : vector<8x128xf32>
      %117 = arith.mulf %116, %12 : vector<8x128xf32>
      %cst_41 = arith.constant 0.055555556 : f32
      %118 = vector.broadcast %cst_41 : f32 to vector<8x128xf32>
      %119 = arith.addf %117, %118 : vector<8x128xf32>
      %120 = arith.mulf %119, %12 : vector<8x128xf32>
      %cst_42 = arith.constant 2.500000e-01 : f32
      %121 = vector.broadcast %cst_42 : f32 to vector<8x128xf32>
      %122 = arith.addf %120, %121 : vector<8x128xf32>
      %123 = arith.mulf %122, %12 : vector<8x128xf32>
      %cst_43 = arith.constant 1.000000e+00 : f32
      %124 = vector.broadcast %cst_43 : f32 to vector<8x128xf32>
      %125 = arith.addf %123, %124 : vector<8x128xf32>
      %126 = arith.mulf %125, %12 : vector<8x128xf32>
      scf.yield %126 : vector<8x128xf32>
    } else {
      %cst_12 = arith.constant 1.73972975E-10 : f32
      %32 = vector.broadcast %cst_12 : f32 to vector<8x128xf32>
      %33 = arith.mulf %32, %12 : vector<8x128xf32>
      %cst_13 = arith.constant 2.27746444E-9 : f32
      %34 = vector.broadcast %cst_13 : f32 to vector<8x128xf32>
      %35 = arith.addf %33, %34 : vector<8x128xf32>
      %36 = arith.mulf %35, %12 : vector<8x128xf32>
      %cst_14 = arith.constant 2.755732E-8 : f32
      %37 = vector.broadcast %cst_14 : f32 to vector<8x128xf32>
      %38 = arith.addf %36, %37 : vector<8x128xf32>
      %39 = arith.mulf %38, %12 : vector<8x128xf32>
      %cst_15 = arith.constant 3.06192447E-7 : f32
      %40 = vector.broadcast %cst_15 : f32 to vector<8x128xf32>
      %41 = arith.addf %39, %40 : vector<8x128xf32>
      %42 = arith.mulf %41, %12 : vector<8x128xf32>
      %cst_16 = arith.constant 3.10019846E-6 : f32
      %43 = vector.broadcast %cst_16 : f32 to vector<8x128xf32>
      %44 = arith.addf %42, %43 : vector<8x128xf32>
      %45 = arith.mulf %44, %12 : vector<8x128xf32>
      %cst_17 = arith.constant 2.83446716E-5 : f32
      %46 = vector.broadcast %cst_17 : f32 to vector<8x128xf32>
      %47 = arith.addf %45, %46 : vector<8x128xf32>
      %48 = arith.mulf %47, %12 : vector<8x128xf32>
      %cst_18 = arith.constant 2.31481477E-4 : f32
      %49 = vector.broadcast %cst_18 : f32 to vector<8x128xf32>
      %50 = arith.addf %48, %49 : vector<8x128xf32>
      %51 = arith.mulf %50, %12 : vector<8x128xf32>
      %cst_19 = arith.constant 0.00166666671 : f32
      %52 = vector.broadcast %cst_19 : f32 to vector<8x128xf32>
      %53 = arith.addf %51, %52 : vector<8x128xf32>
      %54 = arith.mulf %53, %12 : vector<8x128xf32>
      %cst_20 = arith.constant 0.010416667 : f32
      %55 = vector.broadcast %cst_20 : f32 to vector<8x128xf32>
      %56 = arith.addf %54, %55 : vector<8x128xf32>
      %57 = arith.mulf %56, %12 : vector<8x128xf32>
      %cst_21 = arith.constant 0.055555556 : f32
      %58 = vector.broadcast %cst_21 : f32 to vector<8x128xf32>
      %59 = arith.addf %57, %58 : vector<8x128xf32>
      %60 = arith.mulf %59, %12 : vector<8x128xf32>
      %cst_22 = arith.constant 2.500000e-01 : f32
      %61 = vector.broadcast %cst_22 : f32 to vector<8x128xf32>
      %62 = arith.addf %60, %61 : vector<8x128xf32>
      %63 = arith.mulf %62, %12 : vector<8x128xf32>
      %cst_23 = arith.constant 1.000000e+00 : f32
      %64 = vector.broadcast %cst_23 : f32 to vector<8x128xf32>
      %65 = arith.addf %63, %64 : vector<8x128xf32>
      %66 = arith.mulf %65, %12 : vector<8x128xf32>
      scf.yield %66 : vector<8x128xf32>
    }
    %17 = math.absf %0 : vector<8x128xf32>
    %18 = math.log %17 : vector<8x128xf32>
    %cst_5 = arith.constant 0.577215672 : f32
    %19 = vector.broadcast %cst_5 : f32 to vector<8x128xf32>
    %20 = arith.addf %19, %18 : vector<8x128xf32>
    %21 = arith.addf %20, %16 : vector<8x128xf32>
    %22 = math.exp %0 : vector<8x128xf32>
    %cst_6 = arith.constant -1.000000e+00 : f32
    %23 = arith.cmpf olt, %8, %cst_6 : f32
    %24 = arith.extui %23 : i1 to i32
    %c0_i32_7 = arith.constant 0 : i32
    %25 = arith.cmpi ne, %24, %c0_i32_7 : i32
    %26 = scf.if %25 -> (vector<8x128xf32>) {
      %cst_12 = arith.constant -1.000000e+00 : f32
      %32 = vector.broadcast %cst_12 : f32 to vector<8x128xf32>
      %33 = arith.minimumf %0, %32 : vector<8x128xf32>
      %cst_13 = arith.constant 0.000000e+00 : f32
      %34 = vector.broadcast %cst_13 : f32 to vector<8x128xf32>
      %35 = arith.subf %34, %33 : vector<8x128xf32>
      %cst_14 = arith.constant 8.57332897 : f32
      %36 = vector.broadcast %cst_14 : f32 to vector<8x128xf32>
      %37 = arith.addf %35, %36 : vector<8x128xf32>
      %38 = arith.mulf %37, %35 : vector<8x128xf32>
      %cst_15 = arith.constant 18.0590172 : f32
      %39 = vector.broadcast %cst_15 : f32 to vector<8x128xf32>
      %40 = arith.addf %38, %39 : vector<8x128xf32>
      %41 = arith.mulf %40, %35 : vector<8x128xf32>
      %cst_16 = arith.constant 8.63476085 : f32
      %42 = vector.broadcast %cst_16 : f32 to vector<8x128xf32>
      %43 = arith.addf %41, %42 : vector<8x128xf32>
      %44 = arith.mulf %43, %35 : vector<8x128xf32>
      %cst_17 = arith.constant 0.267773747 : f32
      %45 = vector.broadcast %cst_17 : f32 to vector<8x128xf32>
      %46 = arith.addf %44, %45 : vector<8x128xf32>
      %cst_18 = arith.constant 9.57332229 : f32
      %47 = vector.broadcast %cst_18 : f32 to vector<8x128xf32>
      %48 = arith.addf %35, %47 : vector<8x128xf32>
      %49 = arith.mulf %48, %35 : vector<8x128xf32>
      %cst_19 = arith.constant 25.6329556 : f32
      %50 = vector.broadcast %cst_19 : f32 to vector<8x128xf32>
      %51 = arith.addf %49, %50 : vector<8x128xf32>
      %52 = arith.mulf %51, %35 : vector<8x128xf32>
      %cst_20 = arith.constant 21.0996532 : f32
      %53 = vector.broadcast %cst_20 : f32 to vector<8x128xf32>
      %54 = arith.addf %52, %53 : vector<8x128xf32>
      %55 = arith.mulf %54, %35 : vector<8x128xf32>
      %cst_21 = arith.constant 3.95849681 : f32
      %56 = vector.broadcast %cst_21 : f32 to vector<8x128xf32>
      %57 = arith.addf %55, %56 : vector<8x128xf32>
      %58 = arith.mulf %33, %57 : vector<8x128xf32>
      %59 = tpu.reciprocal %58 {approx = true} : vector<8x128xf32> -> vector<8x128xf32>
      %60 = arith.mulf %58, %59 : vector<8x128xf32>
      %cst_22 = arith.constant 2.000000e+00 : f32
      %61 = vector.broadcast %cst_22 : f32 to vector<8x128xf32>
      %62 = arith.subf %61, %60 : vector<8x128xf32>
      %63 = arith.mulf %59, %62 : vector<8x128xf32>
      %cst_23 = arith.constant -1.000000e+00 : f32
      %64 = vector.broadcast %cst_23 : f32 to vector<8x128xf32>
      %65 = arith.cmpf olt, %0, %64 : vector<8x128xf32>
      %66 = arith.mulf %22, %46 : vector<8x128xf32>
      %67 = arith.mulf %66, %63 : vector<8x128xf32>
      %68 = arith.select %65, %67, %21 : vector<8x128xi1>, vector<8x128xf32>
      scf.yield %68 : vector<8x128xf32>
    } else {
      scf.yield %21 : vector<8x128xf32>
    }
    %cst_8 = arith.constant 1.400000e+01 : f32
    %27 = arith.cmpf ogt, %4, %cst_8 : f32
    %28 = arith.extui %27 : i1 to i32
    %c0_i32_9 = arith.constant 0 : i32
    %29 = arith.cmpi ne, %28, %c0_i32_9 : i32
    %30 = scf.if %29 -> (vector<8x128xf32>) {
      %cst_12 = arith.constant 1.400000e+01 : f32
      %32 = vector.broadcast %cst_12 : f32 to vector<8x128xf32>
      %33 = arith.maximumf %0, %32 : vector<8x128xf32>
      %cst_13 = arith.constant 1.000000e+00 : f32
      %34 = vector.broadcast %cst_13 : f32 to vector<8x128xf32>
      %35 = arith.divf %34, %33 : vector<8x128xf32>
      %cst_14 = arith.constant 8.71782891E+10 : f32
      %36 = vector.broadcast %cst_14 : f32 to vector<8x128xf32>
      %37 = arith.mulf %36, %35 : vector<8x128xf32>
      %cst_15 = arith.constant 6.2270208E+9 : f32
      %38 = vector.broadcast %cst_15 : f32 to vector<8x128xf32>
      %39 = arith.addf %37, %38 : vector<8x128xf32>
      %40 = arith.mulf %39, %35 : vector<8x128xf32>
      %cst_16 = arith.constant 0x4DE467E0 : f32
      %41 = vector.broadcast %cst_16 : f32 to vector<8x128xf32>
      %42 = arith.addf %40, %41 : vector<8x128xf32>
      %43 = arith.mulf %42, %35 : vector<8x128xf32>
      %cst_17 = arith.constant 3.991680e+07 : f32
      %44 = vector.broadcast %cst_17 : f32 to vector<8x128xf32>
      %45 = arith.addf %43, %44 : vector<8x128xf32>
      %46 = arith.mulf %45, %35 : vector<8x128xf32>
      %cst_18 = arith.constant 3.628800e+06 : f32
      %47 = vector.broadcast %cst_18 : f32 to vector<8x128xf32>
      %48 = arith.addf %46, %47 : vector<8x128xf32>
      %49 = arith.mulf %48, %35 : vector<8x128xf32>
      %cst_19 = arith.constant 3.628800e+05 : f32
      %50 = vector.broadcast %cst_19 : f32 to vector<8x128xf32>
      %51 = arith.addf %49, %50 : vector<8x128xf32>
      %52 = arith.mulf %51, %35 : vector<8x128xf32>
      %cst_20 = arith.constant 4.032000e+04 : f32
      %53 = vector.broadcast %cst_20 : f32 to vector<8x128xf32>
      %54 = arith.addf %52, %53 : vector<8x128xf32>
      %55 = arith.mulf %54, %35 : vector<8x128xf32>
      %cst_21 = arith.constant 5.040000e+03 : f32
      %56 = vector.broadcast %cst_21 : f32 to vector<8x128xf32>
      %57 = arith.addf %55, %56 : vector<8x128xf32>
      %58 = arith.mulf %57, %35 : vector<8x128xf32>
      %cst_22 = arith.constant 7.200000e+02 : f32
      %59 = vector.broadcast %cst_22 : f32 to vector<8x128xf32>
      %60 = arith.addf %58, %59 : vector<8x128xf32>
      %61 = arith.mulf %60, %35 : vector<8x128xf32>
      %cst_23 = arith.constant 1.200000e+02 : f32
      %62 = vector.broadcast %cst_23 : f32 to vector<8x128xf32>
      %63 = arith.addf %61, %62 : vector<8x128xf32>
      %64 = arith.mulf %63, %35 : vector<8x128xf32>
      %cst_24 = arith.constant 2.400000e+01 : f32
      %65 = vector.broadcast %cst_24 : f32 to vector<8x128xf32>
      %66 = arith.addf %64, %65 : vector<8x128xf32>
      %67 = arith.mulf %66, %35 : vector<8x128xf32>
      %cst_25 = arith.constant 6.000000e+00 : f32
      %68 = vector.broadcast %cst_25 : f32 to vector<8x128xf32>
      %69 = arith.addf %67, %68 : vector<8x128xf32>
      %70 = arith.mulf %69, %35 : vector<8x128xf32>
      %cst_26 = arith.constant 2.000000e+00 : f32
      %71 = vector.broadcast %cst_26 : f32 to vector<8x128xf32>
      %72 = arith.addf %70, %71 : vector<8x128xf32>
      %73 = arith.mulf %72, %35 : vector<8x128xf32>
      %cst_27 = arith.constant 1.000000e+00 : f32
      %74 = vector.broadcast %cst_27 : f32 to vector<8x128xf32>
      %75 = arith.addf %73, %74 : vector<8x128xf32>
      %76 = arith.mulf %75, %35 : vector<8x128xf32>
      %cst_28 = arith.constant 1.000000e+00 : f32
      %77 = vector.broadcast %cst_28 : f32 to vector<8x128xf32>
      %78 = arith.addf %76, %77 : vector<8x128xf32>
      %cst_29 = arith.constant 1.400000e+01 : f32
      %79 = vector.broadcast %cst_29 : f32 to vector<8x128xf32>
      %80 = arith.cmpf ogt, %0, %79 : vector<8x128xf32>
      %81 = arith.mulf %22, %35 : vector<8x128xf32>
      %82 = arith.mulf %81, %78 : vector<8x128xf32>
      %83 = arith.select %80, %82, %26 : vector<8x128xi1>, vector<8x128xf32>
      scf.yield %83 : vector<8x128xf32>
    } else {
      scf.yield %26 : vector<8x128xf32>
    }
    %c0_10 = arith.constant 0 : index
    %c0_11 = arith.constant 0 : index
    %31 = vector.load %arg2[%c0_10, %c0_11] : memref<8x128xf32, #tpu.memory_space<vmem>>, vector<8x128xf32>
    tpu.vector_store %arg2[%c0_10, %c0_11], %30 {strides = array<i32>} : memref<8x128xf32, #tpu.memory_space<vmem>>, vector<8x128xf32>,
    return
  }
  func.func @transform_0(%arg0: i32) -> (i32, i32) {
    %c0_i32 = arith.constant 0 : i32
    %c0_i32_0 = arith.constant 0 : i32
    return %arg0, %c0_i32 : i32, i32
  }
  func.func @transform_1(%arg0: i32) -> (i32, i32) {
    %c0_i32 = arith.constant 0 : i32
    %c0_i32_0 = arith.constant 0 : i32
    return %arg0, %c0_i32 : i32, i32
  }
}

</mosaic_0001>

<llo_original>
// kernel: tpu_custom_call.1
$region0: #{tpu_custom_call.1}
  #allocation0 [shape = 'u32[]', space=smem, size = 0x4, offset = 0x4, fixed_abs, tag = 'smem constant byte address 0x4 - core index']
  #allocation1 [shape = 'u32[144,128]{1,0:T(1,128)}', space=vmem, size = 0x12000, scoped, tag = 'internal scratch']
  %s0 = inlined_call_operand.hbm [shape: f32[16,128], index: 0, kind: input, shape index: {}]
  %s1 = inlined_call_operand.hbm [shape: f32[16,128], index: 1, kind: output, shape index: {}]
  %s2 = sld [smem:[#allocation0]]
  $region65: #{tpu_custom_call.1} parent=0
    _
  %s4 = ssub.s32 1, %s2
  %s5 = scalar_select 0, %s4, %s2
  $region1: #{tpu_custom_call.1} parent=0
    #allocation2 [shape = 'u8[8192]{0}', space=vmem, size = 0x2000, scoped, tag = 'input window, operand 0']
    #allocation3 [shape = 's32[2]{0}', space=sflag, size = 0x8, scoped, tag = 'scoped memory for tpu_custom_call.1']
    #allocation4 [shape = 's32[2]{0}', space=sflag, size = 0x8, scoped, tag = 'scoped memory for tpu_custom_call.1']
    #allocation5 [shape = 'u8[8192]{0}', space=vmem, size = 0x2000, scoped, tag = 'output window, operand 0']
    %6 = vsyncpa [#allocation3], 0
    %s7 = scalar_lea.sflag [#allocation3], 1
    %8 = vsyncpa %s7, 0
    %9 = vsyncpa [#allocation4], 0
    %s10 = scalar_lea.sflag [#allocation4], 1
    %11 = vsyncpa %s10, 0
    loop: start=0, step=1, limit=4
    $region2: #{tpu_custom_call.1} parent=1 // loop_pre_header
      _
    $region3: #{tpu_custom_call.1} parent=1 // loop_header
      %s13 = sphi 0, %s17
      %p14 = scmp.ge.s32.totalorder %s13, 4
      %s23 = sphi 0, %s25
      %s26 = sphi 0, %s23
      %s27 = sphi 0, %s26
      %s43 = sphi 0, %s27
      %s49 = sphi 0, %s51
      %s52 = sphi 0, %s49
      %s53 = sphi 0, %s52
      %s69 = sphi 0, %s53
    $region4: #{tpu_custom_call.1} parent=1 // loop_header_branch
      %16 = sbr.rel (%p14) target = $region8
    $region5: #{tpu_custom_call.1} parent=1 // loop_body
      %s18 = ssub.s32 %s13, 1
      %s19 = ssub.s32 %s13, 2
      %s20 = sadd.s32 %s13, 1
      %s21 = ssub.s32 %s13, %s20
      %p22 = scmp.eq.s32.totalorder %s21, 0
      %s24 = sadd.s32 %s23, 1
      %s25 = scalar_select %p22, %s23, %s24
      %p28 = pneg %p22
      %p29 = scmp.eq.s32.totalorder %s13, 1
      %p30 = por %p28, %p29
      %p31 = scmp.ne.s32.totalorder %s23, %s26
      %p32 = scmp.eq.s32.totalorder %s13, 0
      %p33 = por %p31, %p32
      %p34 = scmp.ne.s32.totalorder %s23, %s26
      %p35 = scmp.eq.s32.totalorder %s18, 1
      %p36 = por %p34, %p35
      %p37 = scmp.ne.s32.totalorder %s26, %s27
      %p38 = scmp.eq.s32.totalorder %s18, 0
      %p39 = por %p37, %p38
      %p40 = scmp.ne.s32.totalorder %s26, %s27
      %p41 = scmp.eq.s32.totalorder %s19, 1
      %p42 = por %p40, %p41
      %p44 = scmp.ne.s32.totalorder %s27, %s43
      %p45 = scmp.eq.s32.totalorder %s19, 0
      %p46 = por %p44, %p45
      %s47 = ssub.s32 %s13, %s20
      %p48 = scmp.eq.s32.totalorder %s47, 0
      %s50 = sadd.s32 %s49, 1
      %s51 = scalar_select %p48, %s49, %s50
      %p54 = pneg %p48
      %p55 = scmp.eq.s32.totalorder %s13, 1
      %p56 = por %p54, %p55
      %p57 = scmp.ne.s32.totalorder %s49, %s52
      %p58 = scmp.eq.s32.totalorder %s13, 0
      %p59 = por %p57, %p58
      %p60 = scmp.ne.s32.totalorder %s49, %s52
      %p61 = scmp.eq.s32.totalorder %s18, 1
      %p62 = por %p60, %p61
      %p63 = scmp.ne.s32.totalorder %s52, %s53
      %p64 = scmp.eq.s32.totalorder %s18, 0
      %p65 = por %p63, %p64
      %p66 = scmp.ne.s32.totalorder %s52, %s53
      %p67 = scmp.eq.s32.totalorder %s19, 1
      %p68 = por %p66, %p67
      %p70 = scmp.ne.s32.totalorder %s53, %s69
      %p71 = scmp.eq.s32.totalorder %s19, 0
      %p72 = por %p70, %p71
      %p73 = scmp.le.s32.totalorder 1, %s13
      %p74 = scmp.lt.s32.totalorder %s13, 3
      %p75 = pnand %p73, %p74
      %p76 = pneg %p75
      // Predicated region
      $region9: #{tpu_custom_call.1} parent=5 // pred_check
        _
      $region10: #{tpu_custom_call.1} parent=5 // pred_check_branch
        %78 = sbr.rel (%p75) target = $region12
      $region11: #{tpu_custom_call.1} parent=5 // pred_region
        %s79 = ssub.s32 %s13, 1
      $region12: #{tpu_custom_call.1} parent=5 // pred_fallthru
        _
      %p80 = scmp.lt.s32.totalorder %s13, 2
      // Predicated region
      $region13: #{tpu_custom_call.1} parent=5 // pred_check
        %p81 = pneg %p80
      $region14: #{tpu_custom_call.1} parent=5 // pred_check_branch
        %83 = sbr.rel (%p81) target = $region16
      $region15: #{tpu_custom_call.1} parent=5 // pred_region
        // Predicated region
        $region17: #{tpu_custom_call.1} parent=15 // pred_check
          %p84 = pneg %p33
        $region18: #{tpu_custom_call.1} parent=15 // pred_check_branch
          %86 = sbr.rel (%p84) target = $region20
        $region19: #{tpu_custom_call.1} parent=15 // pred_region
          %s87 = sand.u32 %s23, 1
          %s88 = scalar_lea.sflag [#allocation3], %s87
          %s89 = sand.u32 %s23, 1
          %s90 = smul.addr %s89, 8
          %s91 = scalar_lea.vmem [#allocation2], %s90
          %s93 = ssub.s32 128, 128
          %94 = vsyncadd %s88, %s93
          %s95 = smul.addr %s13, 128
          %s96 = scalar_lea.hbm %s0, %s95
          %s98 = sshll.u32 %s91, 4
          %s99 = int_to_ptr.vmem [resolvable:$true] %s98
          %101 = dma.hbm_to_vmem [thread:$0]  %s96, 128, %s99, %s88
        $region20: #{tpu_custom_call.1} parent=15 // pred_fallthru
          _
      $region16: #{tpu_custom_call.1} parent=5 // pred_fallthru
        _
      %p102 = scmp.le.s32.totalorder 1, %s13
      %p103 = scmp.lt.s32.totalorder %s13, 3
      %p104 = pnand %p102, %p103
      %p105 = pneg %p104
      // Predicated region
      $region21: #{tpu_custom_call.1} parent=5 // pred_check
        _
      $region22: #{tpu_custom_call.1} parent=5 // pred_check_branch
        %107 = sbr.rel (%p104) target = $region24
      $region23: #{tpu_custom_call.1} parent=5 // pred_region
        %s108 = ssub.s32 %s13, 1
        %s109 = sand.u32 %s26, 1
        %s110 = scalar_lea.sflag [#allocation3], %s109
        %s111 = sand.u32 %s26, 1
        %s112 = smul.addr %s111, 8
        %s113 = scalar_lea.vmem [#allocation2], %s112
        // Predicated region
        $region25: #{tpu_custom_call.1} parent=23 // pred_check
          %p114 = pneg %p39
        $region26: #{tpu_custom_call.1} parent=23 // pred_check_branch
          %116 = sbr.rel (%p114) target = $region28
        $region27: #{tpu_custom_call.1} parent=23 // pred_region
          %117 = dma.done %s110, 128
        $region28: #{tpu_custom_call.1} parent=23 // pred_fallthru
          _
        %s118 = sand.u32 %s26, 1
        %s119 = scalar_lea.sflag [#allocation3], %s118
        %s120 = sand.u32 %s26, 1
        %s121 = smul.addr %s120, 8
        %s122 = scalar_lea.vmem [#allocation2], %s121
        %p123 = pneg %p39
        %p124 = pneg %p36
        %p125 = pneg %p65
        %p126 = pneg %p62
        %s127 = sand.u32 %s52, 1
        %s128 = scalar_lea.sflag [#allocation4], %s127
        %s129 = sand.u32 %s52, 1
        %s130 = smul.addr %s129, 8
        %s131 = scalar_lea.vmem [#allocation5], %s130
        %v132 = vld [vmem:[%s113] sm:$0xff]
        %133 = vmax.xlane.f32.xlu0 %v132
        %v134 = vpop.xlane.xlu0 %133
        %v135 = vrot.slane %v134, 4
        %v136 = vmax.f32 %v134, %v135
        %v137 = vrot.slane %v136, 2
        %v138 = vmax.f32 %v136, %v137
        %v139 = vrot.slane %v138, 1
        %v140 = vmax.f32 %v138, %v139
        %s141 = vtos %v140
        %142 = vmin.xlane.f32.xlu0 %v132
        %v143 = vpop.xlane.xlu0 %142
        %v144 = vrot.slane %v143, 4
        %v145 = vmin.f32 %v143, %v144
        %v146 = vrot.slane %v145, 2
        %v147 = vmin.f32 %v145, %v146
        %v148 = vrot.slane %v147, 1
        %v149 = vmin.f32 %v147, %v148
        %s150 = vtos %v149
        %v151 = vmax.f32 %v132, -1.0
        %v152 = vmin.f32 %v151, 14.0
        %p153 = scmp.gt.f32.partialorder %s141, 1.0
        // Predicated region
        $region29: #{tpu_custom_call.1} parent=23 // pred_check
          %p154 = pneg %p153
        $region30: #{tpu_custom_call.1} parent=23 // pred_check_branch
          %156 = sbr.rel (%p154) target = $region32
        $region31: #{tpu_custom_call.1} parent=23 // pred_region
          %v157 = vmul.f32 %v152, 1.1876221e-37
          %v158 = vadd.f32 %v157, 3.922984e-36
          %v159 = vmul.f32 %v158, %v152
          %v160 = vadd.f32 %v159, 1.2566626e-34
          %v161 = vmul.f32 %v160, %v152
          %v162 = vadd.f32 %v161, 3.8999872e-33
          %v163 = vmul.f32 %v162, %v152
          %v164 = vadd.f32 %v163, 1.171389e-31
          %v165 = vmul.f32 %v164, %v152
          %v166 = vadd.f32 %v165, 3.4013664e-30
          %v167 = vmul.f32 %v166, %v152
          %v168 = vadd.f32 %v167, 9.536909e-29
          %v169 = vmul.f32 %v168, %v152
          %v170 = vadd.f32 %v169, 2.5787801e-27
          %v171 = vmul.f32 %v170, %v152
          %v172 = vadd.f32 %v171, 6.7155735e-26
          %v173 = vmul.f32 %v172, %v152
          %v174 = vadd.f32 %v173, 1.6818132e-24
          %v175 = vmul.f32 %v174, %v152
          %v176 = vadd.f32 %v175, 4.043996e-23
          %v177 = vmul.f32 %v176, %v152
          %v178 = vadd.f32 %v177, 9.320448e-22
          %v179 = vmul.f32 %v178, %v152
          %v180 = vadd.f32 %v179, 2.0551588e-20
          %v181 = vmul.f32 %v180, %v152
          %v182 = vadd.f32 %v181, 4.3266501e-19
          %v183 = vmul.f32 %v182, %v152
          %v184 = vadd.f32 %v183, 8.677337e-18
          %v185 = vmul.f32 %v184, %v152
          %v186 = vadd.f32 %v185, 1.6537983e-16
          %v187 = vmul.f32 %v186, %v152
          %v188 = vadd.f32 %v187, 2.9871733e-15
          %v189 = vmul.f32 %v188, %v152
          %v190 = vadd.f32 %v189, 5.098109e-14
          %v191 = vmul.f32 %v190, %v152
          %v192 = vadd.f32 %v191, 8.1933895e-13
          %v193 = vmul.f32 %v192, %v152
          %v194 = vadd.f32 %v193, 1.2353111e-11
          %v195 = vmul.f32 %v194, %v152
          %v196 = vadd.f32 %v195, 1.7397297e-10
          %v197 = vmul.f32 %v196, %v152
          %v198 = vadd.f32 %v197, 2.2774644e-09
          %v199 = vmul.f32 %v198, %v152
          %v200 = vadd.f32 %v199, 2.755732e-08
          %v201 = vmul.f32 %v200, %v152
          %v202 = vadd.f32 %v201, 3.0619245e-07
          %v203 = vmul.f32 %v202, %v152
          %v204 = vadd.f32 %v203, 3.1001985e-06
          %v205 = vmul.f32 %v204, %v152
          %v206 = vadd.f32 %v205, 2.8344672e-05
          %v207 = vmul.f32 %v206, %v152
          %v208 = vadd.f32 %v207, 0.00023148148
          %v209 = vmul.f32 %v208, %v152
          %v210 = vadd.f32 %v209, 0.0016666667
          %v211 = vmul.f32 %v210, %v152
          %v212 = vadd.f32 %v211, 0.010416667
          %v213 = vmul.f32 %v212, %v152
          %v214 = vadd.f32 %v213, 0.055555556
          %v215 = vmul.f32 %v214, %v152
          %v216 = vadd.f32 %v215, 0.25
          %v217 = vmul.f32 %v216, %v152
          %v218 = vadd.f32 %v217, 1.0
          %v219 = vmul.f32 %v218, %v152
        $region32: #{tpu_custom_call.1} parent=23 // pred_fallthru
          %v220 = vphi 0, %v219
        %p221 = pneg %p153
        // Predicated region
        $region33: #{tpu_custom_call.1} parent=23 // pred_check
          _
        $region34: #{tpu_custom_call.1} parent=23 // pred_check_branch
          %223 = sbr.rel (%p153) target = $region36
        $region35: #{tpu_custom_call.1} parent=23 // pred_region
          %v224 = vmul.f32 %v152, 1.7397297e-10
          %v225 = vadd.f32 %v224, 2.2774644e-09
          %v226 = vmul.f32 %v225, %v152
          %v227 = vadd.f32 %v226, 2.755732e-08
          %v228 = vmul.f32 %v227, %v152
          %v229 = vadd.f32 %v228, 3.0619245e-07
          %v230 = vmul.f32 %v229, %v152
          %v231 = vadd.f32 %v230, 3.1001985e-06
          %v232 = vmul.f32 %v231, %v152
          %v233 = vadd.f32 %v232, 2.8344672e-05
          %v234 = vmul.f32 %v233, %v152
          %v235 = vadd.f32 %v234, 0.00023148148
          %v236 = vmul.f32 %v235, %v152
          %v237 = vadd.f32 %v236, 0.0016666667
          %v238 = vmul.f32 %v237, %v152
          %v239 = vadd.f32 %v238, 0.010416667
          %v240 = vmul.f32 %v239, %v152
          %v241 = vadd.f32 %v240, 0.055555556
          %v242 = vmul.f32 %v241, %v152
          %v243 = vadd.f32 %v242, 0.25
          %v244 = vmul.f32 %v243, %v152
          %v245 = vadd.f32 %v244, 1.0
          %v246 = vmul.f32 %v245, %v152
        $region36: #{tpu_custom_call.1} parent=23 // pred_fallthru
          %v247 = vphi %v220, %v246
        %v248 = vand.u32 2147483647, %v132
        %v249 = vlog2.pop %v248
        %v250 = vmul.f32 %v249, 0.6931472
        %v251 = vadd.f32 %v250, 0.5772157
        %v252 = vadd.f32 %v251, %v247
        %v253 = vmul.f32 %v132, 1.442695
        %v254 = vpow.pop %v253
        %p255 = scmp.lt.f32.partialorder %s150, -1.0
        // Predicated region
        $region37: #{tpu_custom_call.1} parent=23 // pred_check
          %p256 = pneg %p255
        $region38: #{tpu_custom_call.1} parent=23 // pred_check_branch
          %258 = sbr.rel (%p256) target = $region40
        $region39: #{tpu_custom_call.1} parent=23 // pred_region
          %v259 = vmin.f32 %v132, -1.0
          %v260 = vsub.f32 0.0, %v259
          %v261 = vadd.f32 %v260, 8.573329
          %v262 = vmul.f32 %v261, %v260
          %v263 = vadd.f32 %v262, 18.059017
          %v264 = vmul.f32 %v263, %v260
          %v265 = vadd.f32 %v264, 8.634761
          %v266 = vmul.f32 %v265, %v260
          %v267 = vadd.f32 %v266, 0.26777375
          %v268 = vadd.f32 %v260, 9.573322
          %v269 = vmul.f32 %v268, %v260
          %v270 = vadd.f32 %v269, 25.632956
          %v271 = vmul.f32 %v270, %v260
          %v272 = vadd.f32 %v271, 21.099653
          %v273 = vmul.f32 %v272, %v260
          %v274 = vadd.f32 %v273, 3.9584968
          %v275 = vmul.f32 %v259, %v274
          %v276 = vrcp.pop %v275
          %v277 = vmul.f32 %v275, %v276
          %v278 = vsub.f32 2.0, %v277
          %v279 = vmul.f32 %v276, %v278
          %vm280 = vcmp.lt.f32.partialorder %v132, -1.0
          %v281 = vmul.f32 %v254, %v267
          %v282 = vmul.f32 %v281, %v279
          %v283 = vsel %vm280, %v282, %v252
        $region40: #{tpu_custom_call.1} parent=23 // pred_fallthru
          %v284 = vphi 0, %v283
        %p285 = pneg %p255
        // Predicated region
        $region41: #{tpu_custom_call.1} parent=23 // pred_check
          _
        $region42: #{tpu_custom_call.1} parent=23 // pred_check_branch
          %287 = sbr.rel (%p255) target = $region44
        $region43: #{tpu_custom_call.1} parent=23 // pred_region
          _
        $region44: #{tpu_custom_call.1} parent=23 // pred_fallthru
          %v288 = vphi %v284, %v252
        %p289 = scmp.gt.f32.partialorder %s141, 14.0
        // Predicated region
        $region45: #{tpu_custom_call.1} parent=23 // pred_check
          %p290 = pneg %p289
        $region46: #{tpu_custom_call.1} parent=23 // pred_check_branch
          %292 = sbr.rel (%p290) target = $region48
        $region47: #{tpu_custom_call.1} parent=23 // pred_region
          %v293 = vmax.f32 %v132, 14.0
          %v294 = vrcp.pop %v293
          %v295 = vmul.f32 1.0, %v294
          %v296 = vmul.f32 %v295, 8.717829e+10
          %v297 = vadd.f32 %v296, 6.227021e+09
          %v298 = vmul.f32 %v297, %v295
          %v299 = vadd.f32 %v298, 4.790016e+08
          %v300 = vmul.f32 %v299, %v295
          %v301 = vadd.f32 %v300, 39916800.0
          %v302 = vmul.f32 %v301, %v295
          %v303 = vadd.f32 %v302, 3628800.0
          %v304 = vmul.f32 %v303, %v295
          %v305 = vadd.f32 %v304, 362880.0
          %v306 = vmul.f32 %v305, %v295
          %v307 = vadd.f32 %v306, 40320.0
          %v308 = vmul.f32 %v307, %v295
          %v309 = vadd.f32 %v308, 5040.0
          %v310 = vmul.f32 %v309, %v295
          %v311 = vadd.f32 %v310, 720.0
          %v312 = vmul.f32 %v311, %v295
          %v313 = vadd.f32 %v312, 120.0
          %v314 = vmul.f32 %v313, %v295
          %v315 = vadd.f32 %v314, 24.0
          %v316 = vmul.f32 %v315, %v295
          %v317 = vadd.f32 %v316, 6.0
          %v318 = vmul.f32 %v317, %v295
          %v319 = vadd.f32 %v318, 2.0
          %v320 = vmul.f32 %v319, %v295
          %v321 = vadd.f32 %v320, 1.0
          %v322 = vmul.f32 %v321, %v295
          %v323 = vadd.f32 %v322, 1.0
          %vm324 = vcmp.gt.f32.partialorder %v132, 14.0
          %v325 = vmul.f32 %v254, %v295
          %v326 = vmul.f32 %v325, %v323
          %v327 = vsel %vm324, %v326, %v288
        $region48: #{tpu_custom_call.1} parent=23 // pred_fallthru
          %v328 = vphi 0, %v327
        %p329 = pneg %p289
        // Predicated region
        $region49: #{tpu_custom_call.1} parent=23 // pred_check
          _
        $region50: #{tpu_custom_call.1} parent=23 // pred_check_branch
          %331 = sbr.rel (%p289) target = $region52
        $region51: #{tpu_custom_call.1} parent=23 // pred_region
          _
        $region52: #{tpu_custom_call.1} parent=23 // pred_fallthru
          %v332 = vphi %v328, %v288
        %333 = vst [vmem:[%s131] sm:$0xff] %v332
        %s334 = sand.u32 %s52, 1
        %s335 = scalar_lea.sflag [#allocation4], %s334
        %s336 = sand.u32 %s52, 1
        %s337 = smul.addr %s336, 8
        %s338 = scalar_lea.vmem [#allocation5], %s337
        // Predicated region
        $region53: #{tpu_custom_call.1} parent=23 // pred_check
          %p339 = pneg %p62
        $region54: #{tpu_custom_call.1} parent=23 // pred_check_branch
          %341 = sbr.rel (%p339) target = $region56
        $region55: #{tpu_custom_call.1} parent=23 // pred_region
          %s343 = ssub.s32 128, 128
          %344 = vsyncadd %s335, %s343
          %s345 = smul.addr %s18, 128
          %s346 = scalar_lea.hbm %s1, %s345
          %s348 = sshll.u32 %s338, 4
          %s349 = int_to_ptr.vmem [resolvable:$true] %s348
          %351 = dma.vmem_to_hbm [thread:$0]  %s349, 128, %s346, %s335
        $region56: #{tpu_custom_call.1} parent=23 // pred_fallthru
          _
      $region24: #{tpu_custom_call.1} parent=5 // pred_fallthru
        _
      %p352 = scmp.le.s32.totalorder 2, %s13
      // Predicated region
      $region57: #{tpu_custom_call.1} parent=5 // pred_check
        %p353 = pneg %p352
      $region58: #{tpu_custom_call.1} parent=5 // pred_check_branch
        %355 = sbr.rel (%p353) target = $region60
      $region59: #{tpu_custom_call.1} parent=5 // pred_region
        %s356 = ssub.s32 %s13, 2
        // Predicated region
        $region61: #{tpu_custom_call.1} parent=59 // pred_check
          %p357 = pneg %p68
        $region62: #{tpu_custom_call.1} parent=59 // pred_check_branch
          %359 = sbr.rel (%p357) target = $region64
        $region63: #{tpu_custom_call.1} parent=59 // pred_region
          %s360 = sand.u32 %s53, 1
          %s361 = scalar_lea.sflag [#allocation4], %s360
          %s362 = sand.u32 %s53, 1
          %s363 = smul.addr %s362, 8
          %s364 = scalar_lea.vmem [#allocation5], %s363
          %365 = dma.done %s361, 128
        $region64: #{tpu_custom_call.1} parent=59 // pred_fallthru
          _
      $region60: #{tpu_custom_call.1} parent=5 // pred_fallthru
        _
    $region6: #{tpu_custom_call.1} parent=1 // loop_footer
      %s17 = sadd.s32 1, %s13
    $region7: #{tpu_custom_call.1} parent=1 // loop_footer_branch
      %12 = sbr.rel target = $region3
    $region8: #{tpu_custom_call.1} parent=1 // loop_exit
      _
    %366 = vsyncpa [#allocation3], 1
    %s367 = scalar_lea.sflag [#allocation3], 1
    %368 = vsyncpa %s367, 1
    %369 = vsyncpa [#allocation4], 1
    %s370 = scalar_lea.sflag [#allocation4], 1
    %371 = vsyncpa %s370, 1

</llo_original>
